<compile_context>
chip_gen: v7x
topology: tpu7x:2x2x1
jax: 0.10.0
libtpu: 0.0.40
codegen_flags: <defaults>
</compile_context>

<pallas_src>
import functools

import numpy as np
import jax
import jax.numpy as jnp
from jax import lax
from jax.experimental import pallas as pl
from jax.experimental.pallas import tpu as pltpu


# ----------------------------------------------------------------------------
# Synthetic, deterministic Hierarchy (stand-in for Hierarchy.from_json).
# ----------------------------------------------------------------------------
class Hierarchy:
    def __init__(self, categories, parent_map):
        self._categories = list(categories)
        self._parent = dict(parent_map)
        self._children = {c: [] for c in categories}
        for child, par in parent_map.items():
            if par is not None:
                self._children[par].append(child)

    def categories(self):
        return self._categories

    def parents(self, category):
        # ancestor chain from the category itself up to the root (inclusive)
        path = [category]
        while self._parent[path[-1]] is not None:
            path.append(self._parent[path[-1]])
        return path


def _round_up(x, m):
    return (x + m - 1) // m * m


def _choose_tile(batch, num_cat, max_batch_tile=None):
    # Double-buffered input bytes per batch row (logits + target + exp_w, upper
    # bounded as f32) plus the double-buffered lane-dense (row, 128) f32 output.
    per_row = 2 * (3 * 4 * num_cat + 128 * 4)
    budget = 24 * 1024 * 1024            # stay well inside v7x's 64 MiB VMEM
    tb = (budget // per_row) // 8 * 8
    tb = max(8, min(512, tb))
    if max_batch_tile is not None:
        tb = max(8, min(tb, _round_up(int(max_batch_tile), 8)))
    if batch <= tb:
        return _round_up(batch, 8)
    return tb


# ----------------------------------------------------------------------------
# Pallas kernel: all per-sample loss terms of HierarchyCriterion.forward for
# one batch tile.  Losses are packed into lanes 0..5 of a lane-dense (TB, 128)
# output block: [L, L_bce, L_sim, L_cat, L_seq, L_lvl].
# ----------------------------------------------------------------------------
def _criterion_kernel(coefs, num_cat, binary_targets,
                      logits_ref, target_ref, expw_ref, lvlw_ref, out_ref):
    l = logits_ref[...]                              # (TB, C) probabilities, f32
    t = target_ref[...]                              # (TB, C) targets (bf16 or f32)
    ew = expw_ref[...].astype(jnp.float32)           # (TB, C) L_seq exponents (0 off-path)
    lw = lvlw_ref[...]                               # (1, C)  L_lvl averaging weights
    tb = l.shape[0]

    # hierarchy masks derived in-kernel (saves two full HBM input streams)
    pm = (ew > 0.0).astype(jnp.float32)              # ancestor-path mask
    lm = (ew == 2.0).astype(jnp.float32)             # one-hot of order_i[0] (exponent 2^1)

    if binary_targets:
        # bce = -log(l) if t==1 else -log(1-l)  -> one transcendental per element.
        # log(1 - |l - t|) equals the same log for binary t, so L_seq reuses it.
        sel = jnp.where(t > 0.5, l, 1.0 - l)
        log_sel = jnp.maximum(jnp.log(sel), -100.0)  # PyTorch clamps log() at -100
        bce = -log_sel
        log_f = log_sel
    else:
        log_l = jnp.maximum(jnp.log(l), -100.0)
        log_1l = jnp.maximum(jnp.log(1.0 - l), -100.0)
        tf = t.astype(jnp.float32)
        bce = -(tf * log_l + (1.0 - tf) * log_1l)
        log_f = jnp.log(jnp.maximum(1.0 - jnp.abs(l - tf), 1e-30))

    # L_bce: mean BCE over all categories
    L_bce = jnp.sum(bce, axis=1, keepdims=True) * (1.0 / num_cat)

    # L_sim: unbiased variance (torch.var default) of logits on the ancestor
    # path — single-pass form to avoid the reduce->broadcast->reduce chain.
    n = jnp.sum(pm, axis=1, keepdims=True)
    s1 = jnp.sum(pm * l, axis=1, keepdims=True)
    s2 = jnp.sum(pm * (l * l), axis=1, keepdims=True)
    # n == 1 (root category) -> ~0/0 = nan, matching torch.var of a single
    # element; n == 0 only occurs on batch-padding rows and yields 0.
    L_sim = (s2 - s1 * s1 / jnp.maximum(n, 1.0)) / (n - 1.0)

    # L_cat: BCE at order_i[0]
    L_cat = jnp.sum(lm * bce, axis=1, keepdims=True)

    # L_seq: prod_j (1 - |l_j - t_j|)^{2^(j+1)} over the path, in log space
    prod = jnp.exp(jnp.sum(ew * log_f, axis=1, keepdims=True))
    L_seq = (1.0 - prod) * L_bce

    # L_lvl: mean over parents of (mean BCE over that parent's children); the
    # double mean collapses into one static per-category weight row.
    L_lvl = jnp.sum(lw * bce, axis=1, keepdims=True)

    cb, cs, cc, cq, cl = coefs
    L = L_bce * cb + L_sim * cs + L_cat * cc + L_seq * cq + L_lvl * cl

    # Pack the six per-sample scalars into lanes 0..5 of a lane-dense block.
    lane = lax.broadcasted_iota(jnp.int32, (tb, 128), 1)

    def put(col, v):
        return v * (lane == col).astype(jnp.float32)

    out_ref[...] = (put(0, L) + put(1, L_bce) + put(2, L_sim)
                    + put(3, L_cat) + put(4, L_seq) + put(5, L_lvl))


# ----------------------------------------------------------------------------
# Host-side wrapper.
# ----------------------------------------------------------------------------
class HierarchyCriterionPallas:
    def __init__(self, hierarchy, L_bce_coef, L_sim_coef, L_cat_coef,
                 L_seq_coef, L_lvl_coef, assume_binary_targets=True,
                 max_batch_tile=None):
        self.hierarchy = hierarchy
        self.coefs = (float(L_bce_coef), float(L_sim_coef), float(L_cat_coef),
                      float(L_seq_coef), float(L_lvl_coef))
        self.binary_targets = bool(assume_binary_targets)
        self.max_batch_tile = max_batch_tile

        cats = hierarchy.categories()
        C = len(cats)
        self._num_cat = C
        self._cat_index = {c: i for i, c in enumerate(cats)}

        # Per-category exponent rows for L_seq: row c has 2^(j+1) at the j-th
        # ancestor of c (j=0 is c itself), 0 elsewhere.  Powers of two are exact
        # in bf16, which halves this stream's HBM traffic.
        # TODO(synk): for very large C, replace this dense (C, C) table with a
        # (C, max_depth) ancestor-index table + device-side scatter.
        expw = np.zeros((C, C), np.float32)
        for ci, cname in enumerate(cats):
            order_i = [self._cat_index[p] for p in hierarchy.parents(cname)]
            for j, idx in enumerate(order_i):
                expw[ci, idx] = float(2 ** (j + 1))
            # the in-kernel leaf-mask derivation (ew == 2) relies on this:
            assert expw[ci, order_i[0]] == 2.0
            assert int(np.count_nonzero(expw[ci] == 2.0)) == 1
        self._expw_table = jnp.asarray(expw, jnp.bfloat16)       # (C, C)

        # Static L_lvl weights: mean over non-empty parents of mean over children.
        nonempty = [(p, ch) for p, ch in hierarchy._children.items() if len(ch) > 0]
        lvl = np.zeros((C,), np.float32)
        for _, ch in nonempty:
            for c in ch:
                lvl[self._cat_index[c]] += 1.0 / (len(ch) * len(nonempty))
        self._lvl_w = jnp.asarray(lvl[None, :], jnp.float32)     # (1, C)

    def __call__(self, output, batch):
        logits = jnp.asarray(output['logits'], jnp.float32)      # (B, C) probabilities
        category = batch['category']                             # list[str], len B
        B, C = logits.shape
        assert C == self._num_cat

        tgt_dtype = jnp.bfloat16 if self.binary_targets else jnp.float32
        target = jnp.asarray(batch['target'], tgt_dtype)

        # category-name -> index lookup is host-side (strings); the exponent
        # rows themselves are gathered on device from the precomputed table.
        cat_idx = np.asarray([self._cat_index[c] for c in category], np.int32)
        exp_w = jnp.take(self._expw_table, jnp.asarray(cat_idx), axis=0)  # (B, C) bf16

        tb = _choose_tile(B, C, self.max_batch_tile)
        B_pad = _round_up(B, tb)
        if B_pad != B:
            pad = B_pad - B
            logits = jnp.pad(logits, ((0, pad), (0, 0)), constant_values=0.5)
            target = jnp.pad(target, ((0, pad), (0, 0)))
            exp_w = jnp.pad(exp_w, ((0, pad), (0, 0)))
        grid = (B_pad // tb,)

        row_spec = pl.BlockSpec((tb, C), lambda i: (i, 0))
        out = pl.pallas_call(
            functools.partial(_criterion_kernel, self.coefs, C, self.binary_targets),
            grid=grid,
            in_specs=[row_spec,                                   # logits
                      row_spec,                                   # target
                      row_spec,                                   # exp_w
                      pl.BlockSpec((1, C), lambda i: (0, 0))],    # lvl_w (broadcast row)
            out_specs=pl.BlockSpec((tb, 128), lambda i: (i, 0)),  # lane-dense packed losses
            out_shape=jax.ShapeDtypeStruct((B_pad, 128), jnp.float32),
            compiler_params=pltpu.CompilerParams(
                dimension_semantics=("parallel",),
                vmem_limit_bytes=48 * 1024 * 1024),
        )(logits, target, exp_w, self._lvl_w)

        valid = out[:B]
        # total_loss = mean over samples; `losses` holds the last sample's values
        # (mirrors the PyTorch loop, which leaks the last iteration's variables).
        return {
            'total_loss': jnp.mean(valid[:, 0]),
            'losses': {
                'L_bce': valid[-1, 1],
                'L_sim': valid[-1, 2],
                'L_cat': valid[-1, 3],
                'L_seq': valid[-1, 4],
                'L_lvl': valid[-1, 5],
            },
        }


# ----------------------------------------------------------------------------
# Pure-numpy reference mirroring the PyTorch loop (for a sanity check).
# ----------------------------------------------------------------------------
def _reference(hier, coefs, logits, target, category):
    cats = hier.categories()
    cb, cs, cc, cq, cl = coefs

    def bce(p, t):
        return -(t * np.maximum(np.log(p), -100.0)
                 + (1 - t) * np.maximum(np.log(1 - p), -100.0))

    Ls = []
    for s in range(logits.shape[0]):
        order_i = [cats.index(c) for c in hier.parents(category[s])]
        L_bce = bce(logits[s], target[s]).mean()
        L_sim = np.var(logits[s, order_i], ddof=1)
        L_cat = bce(logits[s, order_i[0]], target[s, order_i[0]])
        L_seq = 1.0
        for i in order_i[::-1]:
            L_seq = ((1 - abs(logits[s, i] - target[s, i])) * L_seq) ** 2
        L_seq = (1 - L_seq) * L_bce
        lvls = []
        for p, ch in hier._children.items():
            if len(ch) == 0:
                continue
            ci = [cats.index(c) for c in ch]
            lvls.append(bce(logits[s, ci], target[s, ci]).mean())
        L_lvl = np.mean(lvls)
        Ls.append(L_bce * cb + L_sim * cs + L_cat * cc + L_seq * cq + L_lvl * cl)
    return np.mean(Ls), dict(L_bce=L_bce, L_sim=L_sim, L_cat=L_cat,
                             L_seq=L_seq, L_lvl=L_lvl)


def _check(crit, hier, logits, target, category):
    result = crit({'logits': logits}, {'target': target, 'category': category})
    total = float(jax.block_until_ready(result['total_loss']))
    losses = {k: float(jax.block_until_ready(v)) for k, v in result['losses'].items()}
    ref_total, ref_losses = _reference(hier, crit.coefs,
                                       np.asarray(logits, np.float32),
                                       np.asarray(target, np.float32),
                                       category)
    assert np.isfinite(total)
    assert np.allclose(total, ref_total, rtol=2e-3, atol=2e-4), (total, ref_total)
    for k in losses:
        assert np.allclose(losses[k], ref_losses[k], rtol=2e-3, atol=2e-4), \
            (k, losses[k], ref_losses[k])


if __name__ == "__main__":
    # Deterministic synthetic hierarchy with 8 categories.
    categories = ["root", "a", "b", "a1", "a2", "b1", "b2", "a1x"]
    parent_map = {"root": None, "a": "root", "b": "root",
                  "a1": "a", "a2": "a", "b1": "b", "b2": "b", "a1x": "a1"}
    hier = Hierarchy(categories, parent_map)
    C = len(categories)

    key = jax.random.PRNGKey(0)

    # --- check 1: tiny batch (single tile, padded rows) ---------------------
    B = 2
    k1, k2, key = jax.random.split(key, 3)
    logits = jax.random.uniform(k1, (B, C), jnp.float32, 0.02, 0.98)
    target = (jax.random.uniform(k2, (B, C)) > 0.5).astype(jnp.float32)
    category = ["a1x", "b2"]
    crit = HierarchyCriterionPallas(hier, L_bce_coef=1.0, L_sim_coef=0.5,
                                    L_cat_coef=0.7, L_seq_coef=0.3,
                                    L_lvl_coef=0.9)
    _check(crit, hier, logits, target, category)

    # --- check 2: multi-tile grid (forced TB=8, B=20 -> grid of 3, padding) -
    B2 = 20
    k3, k4, key = jax.random.split(key, 3)
    logits2 = jax.random.uniform(k3, (B2, C), jnp.float32, 0.02, 0.98)
    target2 = (jax.random.uniform(k4, (B2, C)) > 0.5).astype(jnp.float32)
    leaf_cats = ["a1x", "b2", "a2", "b1", "a1"]
    category2 = [leaf_cats[i % len(leaf_cats)] for i in range(B2)]
    crit2 = HierarchyCriterionPallas(hier, L_bce_coef=1.0, L_sim_coef=0.5,
                                     L_cat_coef=0.7, L_seq_coef=0.3,
                                     L_lvl_coef=0.9, max_batch_tile=8)
    _check(crit2, hier, logits2, target2, category2)

    print("KERNEL_OK")
</pallas_src>

<mosaic_0001>
module attributes {stable_mosaic.version = 11 : i64} {
  func.func @_criterion_kernel(%arg0: i32, %arg1: memref<8x8xf32, #tpu.memory_space<vmem>>, %arg2: memref<8x8xbf16, #tpu.memory_space<vmem>>, %arg3: memref<8x8xbf16, #tpu.memory_space<vmem>>, %arg4: memref<1x8xf32, #tpu.memory_space<vmem>>, %arg5: memref<8x128xf32, #tpu.memory_space<vmem>>) attributes {dimension_semantics = [#tpu.dimension_semantics<parallel>], iteration_bounds = array<i64: 1>, scalar_prefetch = 0 : i64, scratch_operands = 0 : i64, tpu.core_type = #tpu.core_type<tc>, window_params = [{transform_indices = @transform_0, window_bounds = array<i64: 8, 8>}, {transform_indices = @transform_1, window_bounds = array<i64: 8, 8>}, {transform_indices = @transform_2, window_bounds = array<i64: 8, 8>}, {pipeline_mode = #tpu.pipeline_mode<synchronous>, transform_indices = @transform_3, window_bounds = array<i64: 1, 8>}, {transform_indices = @transform_4, window_bounds = array<i64: 8, 128>}]} {
    %c0 = arith.constant 0 : index
    %c0_0 = arith.constant 0 : index
    %0 = vector.load %arg1[%c0, %c0_0] : memref<8x8xf32, #tpu.memory_space<vmem>>, vector<8x8xf32>
    %c0_1 = arith.constant 0 : index
    %c0_2 = arith.constant 0 : index
    %1 = vector.load %arg2[%c0_1, %c0_2] : memref<8x8xbf16, #tpu.memory_space<vmem>>, vector<8x8xbf16>
    %c0_3 = arith.constant 0 : index
    %c0_4 = arith.constant 0 : index
    %2 = vector.load %arg3[%c0_3, %c0_4] : memref<8x8xbf16, #tpu.memory_space<vmem>>, vector<8x8xbf16>
    %3 = arith.extf %2 : vector<8x8xbf16> to vector<8x8xf32>
    %c0_5 = arith.constant 0 : index
    %c0_6 = arith.constant 0 : index
    %4 = vector.load %arg4[%c0_5, %c0_6] : memref<1x8xf32, #tpu.memory_space<vmem>>, vector<1x8xf32>
    %cst = arith.constant 0.000000e+00 : f32
    %5 = vector.broadcast %cst : f32 to vector<8x8xf32>
    %6 = arith.cmpf ogt, %3, %5 : vector<8x8xf32>
    %7 = arith.extui %6 : vector<8x8xi1> to vector<8x8xi32>
    %8 = arith.sitofp %7 : vector<8x8xi32> to vector<8x8xf32>
    %cst_7 = arith.constant 2.000000e+00 : f32
    %9 = vector.broadcast %cst_7 : f32 to vector<8x8xf32>
    %10 = arith.cmpf oeq, %3, %9 : vector<8x8xf32>
    %11 = arith.extui %10 : vector<8x8xi1> to vector<8x8xi32>
    %12 = arith.sitofp %11 : vector<8x8xi32> to vector<8x8xf32>
    %cst_8 = arith.constant 5.000000e-01 : bf16
    %13 = vector.broadcast %cst_8 : bf16 to vector<8x8xbf16>
    %14 = arith.cmpf ogt, %1, %13 : vector<8x8xbf16>
    %cst_9 = arith.constant 1.000000e+00 : f32
    %15 = vector.broadcast %cst_9 : f32 to vector<8x8xf32>
    %16 = arith.subf %15, %0 : vector<8x8xf32>
    %17 = arith.select %14, %0, %16 : vector<8x8xi1>, vector<8x8xf32>
    %18 = math.log %17 : vector<8x8xf32>
    %cst_10 = arith.constant -1.000000e+02 : f32
    %19 = vector.broadcast %cst_10 : f32 to vector<8x8xf32>
    %20 = arith.maximumf %18, %19 : vector<8x8xf32>
    %cst_11 = arith.constant 0.000000e+00 : f32
    %21 = vector.broadcast %cst_11 : f32 to vector<8x8xf32>
    %22 = arith.subf %21, %20 : vector<8x8xf32>
    %cst_12 = arith.constant dense<0.000000e+00> : vector<8xf32>
    %23 = vector.multi_reduction <add>, %22, %cst_12 [1] : vector<8x8xf32> to vector<8xf32>
    %24 = vector.shape_cast %23 : vector<8xf32> to vector<8x1xf32>
    %cst_13 = arith.constant 1.250000e-01 : f32
    %25 = vector.broadcast %cst_13 : f32 to vector<8x1xf32>
    %26 = arith.mulf %24, %25 : vector<8x1xf32>
    %cst_14 = arith.constant dense<0.000000e+00> : vector<8xf32>
    %27 = vector.multi_reduction <add>, %8, %cst_14 [1] : vector<8x8xf32> to vector<8xf32>
    %28 = vector.shape_cast %27 : vector<8xf32> to vector<8x1xf32>
    %29 = arith.mulf %8, %0 : vector<8x8xf32>
    %cst_15 = arith.constant dense<0.000000e+00> : vector<8xf32>
    %30 = vector.multi_reduction <add>, %29, %cst_15 [1] : vector<8x8xf32> to vector<8xf32>
    %31 = vector.shape_cast %30 : vector<8xf32> to vector<8x1xf32>
    %32 = arith.mulf %0, %0 : vector<8x8xf32>
    %33 = arith.mulf %8, %32 : vector<8x8xf32>
    %cst_16 = arith.constant dense<0.000000e+00> : vector<8xf32>
    %34 = vector.multi_reduction <add>, %33, %cst_16 [1] : vector<8x8xf32> to vector<8xf32>
    %35 = vector.shape_cast %34 : vector<8xf32> to vector<8x1xf32>
    %36 = arith.mulf %31, %31 : vector<8x1xf32>
    %cst_17 = arith.constant 1.000000e+00 : f32
    %37 = vector.broadcast %cst_17 : f32 to vector<8x1xf32>
    %38 = arith.maximumf %28, %37 : vector<8x1xf32>
    %39 = arith.divf %36, %38 : vector<8x1xf32>
    %40 = arith.subf %35, %39 : vector<8x1xf32>
    %cst_18 = arith.constant 1.000000e+00 : f32
    %41 = vector.broadcast %cst_18 : f32 to vector<8x1xf32>
    %42 = arith.subf %28, %41 : vector<8x1xf32>
    %43 = arith.divf %40, %42 : vector<8x1xf32>
    %44 = arith.mulf %12, %22 : vector<8x8xf32>
    %cst_19 = arith.constant dense<0.000000e+00> : vector<8xf32>
    %45 = vector.multi_reduction <add>, %44, %cst_19 [1] : vector<8x8xf32> to vector<8xf32>
    %46 = vector.shape_cast %45 : vector<8xf32> to vector<8x1xf32>
    %47 = arith.mulf %3, %20 : vector<8x8xf32>
    %cst_20 = arith.constant dense<0.000000e+00> : vector<8xf32>
    %48 = vector.multi_reduction <add>, %47, %cst_20 [1] : vector<8x8xf32> to vector<8xf32>
    %49 = vector.shape_cast %48 : vector<8xf32> to vector<8x1xf32>
    %50 = math.exp %49 : vector<8x1xf32>
    %cst_21 = arith.constant 1.000000e+00 : f32
    %51 = vector.broadcast %cst_21 : f32 to vector<8x1xf32>
    %52 = arith.subf %51, %50 : vector<8x1xf32>
    %53 = arith.mulf %52, %26 : vector<8x1xf32>
    %54 = vector.broadcast %4 : vector<1x8xf32> to vector<8x8xf32>
    %55 = arith.mulf %54, %22 : vector<8x8xf32>
    %cst_22 = arith.constant dense<0.000000e+00> : vector<8xf32>
    %56 = vector.multi_reduction <add>, %55, %cst_22 [1] : vector<8x8xf32> to vector<8xf32>
    %57 = vector.shape_cast %56 : vector<8xf32> to vector<8x1xf32>
    %cst_23 = arith.constant 1.000000e+00 : f32
    %58 = vector.broadcast %cst_23 : f32 to vector<8x1xf32>
    %59 = arith.mulf %26, %58 : vector<8x1xf32>
    %cst_24 = arith.constant 5.000000e-01 : f32
    %60 = vector.broadcast %cst_24 : f32 to vector<8x1xf32>
    %61 = arith.mulf %43, %60 : vector<8x1xf32>
    %62 = arith.addf %59, %61 : vector<8x1xf32>
    %cst_25 = arith.constant 0.699999988 : f32
    %63 = vector.broadcast %cst_25 : f32 to vector<8x1xf32>
    %64 = arith.mulf %46, %63 : vector<8x1xf32>
    %65 = arith.addf %62, %64 : vector<8x1xf32>
    %cst_26 = arith.constant 3.000000e-01 : f32
    %66 = vector.broadcast %cst_26 : f32 to vector<8x1xf32>
    %67 = arith.mulf %53, %66 : vector<8x1xf32>
    %68 = arith.addf %65, %67 : vector<8x1xf32>
    %cst_27 = arith.constant 0.899999976 : f32
    %69 = vector.broadcast %cst_27 : f32 to vector<8x1xf32>
    %70 = arith.mulf %57, %69 : vector<8x1xf32>
    %71 = arith.addf %68, %70 : vector<8x1xf32>
    %72 = tpu.iota {dimensions = array<i32: 1>} : vector<8x128xi32>
    %c0_i32 = arith.constant 0 : i32
    %73 = vector.broadcast %c0_i32 : i32 to vector<8x128xi32>
    %74 = arith.cmpi eq, %72, %73 : vector<8x128xi32>
    %75 = arith.extui %74 : vector<8x128xi1> to vector<8x128xi32>
    %76 = arith.sitofp %75 : vector<8x128xi32> to vector<8x128xf32>
    %77 = vector.broadcast %71 : vector<8x1xf32> to vector<8x128xf32>
    %78 = arith.mulf %77, %76 : vector<8x128xf32>
    %c1_i32 = arith.constant 1 : i32
    %79 = vector.broadcast %c1_i32 : i32 to vector<8x128xi32>
    %80 = arith.cmpi eq, %72, %79 : vector<8x128xi32>
    %81 = arith.extui %80 : vector<8x128xi1> to vector<8x128xi32>
    %82 = arith.sitofp %81 : vector<8x128xi32> to vector<8x128xf32>
    %83 = vector.broadcast %26 : vector<8x1xf32> to vector<8x128xf32>
    %84 = arith.mulf %83, %82 : vector<8x128xf32>
    %85 = arith.addf %78, %84 : vector<8x128xf32>
    %c2_i32 = arith.constant 2 : i32
    %86 = vector.broadcast %c2_i32 : i32 to vector<8x128xi32>
    %87 = arith.cmpi eq, %72, %86 : vector<8x128xi32>
    %88 = arith.extui %87 : vector<8x128xi1> to vector<8x128xi32>
    %89 = arith.sitofp %88 : vector<8x128xi32> to vector<8x128xf32>
    %90 = vector.broadcast %43 : vector<8x1xf32> to vector<8x128xf32>
    %91 = arith.mulf %90, %89 : vector<8x128xf32>
    %92 = arith.addf %85, %91 : vector<8x128xf32>
    %c3_i32 = arith.constant 3 : i32
    %93 = vector.broadcast %c3_i32 : i32 to vector<8x128xi32>
    %94 = arith.cmpi eq, %72, %93 : vector<8x128xi32>
    %95 = arith.extui %94 : vector<8x128xi1> to vector<8x128xi32>
    %96 = arith.sitofp %95 : vector<8x128xi32> to vector<8x128xf32>
    %97 = vector.broadcast %46 : vector<8x1xf32> to vector<8x128xf32>
    %98 = arith.mulf %97, %96 : vector<8x128xf32>
    %99 = arith.addf %92, %98 : vector<8x128xf32>
    %c4_i32 = arith.constant 4 : i32
    %100 = vector.broadcast %c4_i32 : i32 to vector<8x128xi32>
    %101 = arith.cmpi eq, %72, %100 : vector<8x128xi32>
    %102 = arith.extui %101 : vector<8x128xi1> to vector<8x128xi32>
    %103 = arith.sitofp %102 : vector<8x128xi32> to vector<8x128xf32>
    %104 = vector.broadcast %53 : vector<8x1xf32> to vector<8x128xf32>
    %105 = arith.mulf %104, %103 : vector<8x128xf32>
    %106 = arith.addf %99, %105 : vector<8x128xf32>
    %c5_i32 = arith.constant 5 : i32
    %107 = vector.broadcast %c5_i32 : i32 to vector<8x128xi32>
    %108 = arith.cmpi eq, %72, %107 : vector<8x128xi32>
    %109 = arith.extui %108 : vector<8x128xi1> to vector<8x128xi32>
    %110 = arith.sitofp %109 : vector<8x128xi32> to vector<8x128xf32>
    %111 = vector.broadcast %57 : vector<8x1xf32> to vector<8x128xf32>
    %112 = arith.mulf %111, %110 : vector<8x128xf32>
    %113 = arith.addf %106, %112 : vector<8x128xf32>
    %c0_28 = arith.constant 0 : index
    %c0_29 = arith.constant 0 : index
    %114 = vector.load %arg5[%c0_28, %c0_29] : memref<8x128xf32, #tpu.memory_space<vmem>>, vector<8x128xf32>
    tpu.vector_store %arg5[%c0_28, %c0_29], %113 {strides = array<i32>} : memref<8x128xf32, #tpu.memory_space<vmem>>, vector<8x128xf32>,
    return
  }
  func.func @transform_0(%arg0: i32) -> (i32, i32) {
    %c0_i32 = arith.constant 0 : i32
    %c0_i32_0 = arith.constant 0 : i32
    return %arg0, %c0_i32 : i32, i32
  }
  func.func @transform_1(%arg0: i32) -> (i32, i32) {
    %c0_i32 = arith.constant 0 : i32
    %c0_i32_0 = arith.constant 0 : i32
    return %arg0, %c0_i32 : i32, i32
  }
  func.func @transform_2(%arg0: i32) -> (i32, i32) {
    %c0_i32 = arith.constant 0 : i32
    %c0_i32_0 = arith.constant 0 : i32
    return %arg0, %c0_i32 : i32, i32
  }
  func.func @transform_3(%arg0: i32) -> (i32, i32) {
    %c0_i32 = arith.constant 0 : i32
    %c0_i32_0 = arith.constant 0 : i32
    %c0_i32_1 = arith.constant 0 : i32
    return %c0_i32, %c0_i32_0 : i32, i32
  }
  func.func @transform_4(%arg0: i32) -> (i32, i32) {
    %c0_i32 = arith.constant 0 : i32
    %c0_i32_0 = arith.constant 0 : i32
    return %arg0, %c0_i32 : i32, i32
  }
}

</mosaic_0001>

<llo_original>
// kernel: tpu_custom_call.1
$region0: #{tpu_custom_call.1}
  #allocation0 [shape = 'u32[]', space=smem, size = 0x4, offset = 0x4, fixed_abs, tag = 'smem constant byte address 0x4 - core index']
  #allocation1 [shape = 'u32[144,128]{1,0:T(1,128)}', space=vmem, size = 0x12000, scoped, tag = 'internal scratch']
  %s0 = inlined_call_operand.hbm [shape: f32[8,8], index: 0, kind: input, shape index: {}]
  %s1 = inlined_call_operand.hbm [shape: bf16[8,8], index: 1, kind: input, shape index: {}]
  %s2 = inlined_call_operand.vmem [shape: bf16[8,8], index: 2, kind: input, shape index: {}]
  %s3 = inlined_call_operand.vmem [shape: f32[1,8], index: 3, kind: input, shape index: {}]
  %s4 = inlined_call_operand.hbm [shape: f32[8,128], index: 4, kind: output, shape index: {}]
  %s5 = sld [smem:[#allocation0]]
  $region34: #{tpu_custom_call.1} parent=0
    _
  %s7 = ssub.s32 1, %s5
  %s8 = scalar_select 0, %s7, %s5
  $region1: #{tpu_custom_call.1} parent=0
    #allocation2 [shape = 'u8[4096]{0}', space=vmem, size = 0x1000, scoped, tag = 'input window, operand 0, single buffered']
    #allocation3 [shape = 's32[1]{0}', space=sflag, size = 0x4, scoped, tag = 'scoped memory for tpu_custom_call.1']
    #allocation4 [shape = 's32[1]{0}', space=sflag, size = 0x4, scoped, tag = 'scoped memory for tpu_custom_call.1']
    #allocation5 [shape = 'u8[2048]{0}', space=vmem, size = 0x800, scoped, tag = 'input window, operand 1, single buffered']
    #allocation6 [shape = 's32[1]{0}', space=sflag, size = 0x4, scoped, tag = 'scoped memory for tpu_custom_call.1']
    #allocation7 [shape = 'u8[4096]{0}', space=vmem, size = 0x1000, scoped, tag = 'output window, operand 0, single buffered']
    %9 = vsyncpa [#allocation3], 0
    %10 = vsyncpa [#allocation6], 0
    %11 = vsyncpa [#allocation4], 0
    // Predicated region
    $region2: #{tpu_custom_call.1} parent=1 // pred_check
      _
    $region3: #{tpu_custom_call.1} parent=1 // pred_check_branch
      %13 = sbr.rel (0) target = $region5
    $region4: #{tpu_custom_call.1} parent=1 // pred_region
      %s15 = ssub.s32 128, 128
      %16 = vsyncadd [#allocation3], %s15
      %s18 = sshll.u32 [#allocation2], 4
      %s19 = int_to_ptr.vmem [resolvable:$true] %s18
      %21 = dma.hbm_to_vmem [thread:$0]  %s0, 128, %s19, [#allocation3]
    $region5: #{tpu_custom_call.1} parent=1 // pred_fallthru
      _
    // Predicated region
    $region6: #{tpu_custom_call.1} parent=1 // pred_check
      _
    $region7: #{tpu_custom_call.1} parent=1 // pred_check_branch
      %23 = sbr.rel (0) target = $region9
    $region8: #{tpu_custom_call.1} parent=1 // pred_region
      %s25 = ssub.s32 64, 64
      %26 = vsyncadd [#allocation6], %s25
      %s28 = sshll.u32 [#allocation5], 4
      %s29 = int_to_ptr.vmem [resolvable:$true] %s28
      %31 = dma.hbm_to_vmem [thread:$0]  %s1, 64, %s29, [#allocation6]
    $region9: #{tpu_custom_call.1} parent=1 // pred_fallthru
      _
    // Predicated region
    $region10: #{tpu_custom_call.1} parent=1 // pred_check
      _
    $region11: #{tpu_custom_call.1} parent=1 // pred_check_branch
      %33 = sbr.rel (0) target = $region13
    $region12: #{tpu_custom_call.1} parent=1 // pred_region
      _
    $region13: #{tpu_custom_call.1} parent=1 // pred_fallthru
      _
    // Predicated region
    $region14: #{tpu_custom_call.1} parent=1 // pred_check
      _
    $region15: #{tpu_custom_call.1} parent=1 // pred_check_branch
      %35 = sbr.rel (0) target = $region17
    $region16: #{tpu_custom_call.1} parent=1 // pred_region
      _
    $region17: #{tpu_custom_call.1} parent=1 // pred_fallthru
      _
    // Predicated region
    $region18: #{tpu_custom_call.1} parent=1 // pred_check
      _
    $region19: #{tpu_custom_call.1} parent=1 // pred_check_branch
      %37 = sbr.rel (0) target = $region21
    $region20: #{tpu_custom_call.1} parent=1 // pred_region
      %38 = dma.done [#allocation3], 128
    $region21: #{tpu_custom_call.1} parent=1 // pred_fallthru
      _
    // Predicated region
    $region22: #{tpu_custom_call.1} parent=1 // pred_check
      _
    $region23: #{tpu_custom_call.1} parent=1 // pred_check_branch
      %40 = sbr.rel (0) target = $region25
    $region24: #{tpu_custom_call.1} parent=1 // pred_region
      %41 = dma.done [#allocation6], 64
    $region25: #{tpu_custom_call.1} parent=1 // pred_fallthru
      _
    %v45 = vld [vmem:[#allocation2] sm:$0xff]
    %v46 = vld [vmem:[#allocation5] sm:$0xf]
    %v47 = vld [vmem:[%s2] sm:$0xf]
    %v48 = vunpack.c.l.bf16 %v47
    %v49 = vld [vmem:[%s3] sm:$0x1]
    %vm50 = vcmp.gt.f32.partialorder %v48, 0.0
    %v51 = vsel %vm50, 1, 0
    %v52 = vcvt.s32.f32 %v51
    %vm53 = vcmp.eq.f32.partialorder %v48, 2.0
    %v54 = vsel %vm53, 1, 0
    %v55 = vcvt.s32.f32 %v54
    %vm56 = vcmp.gt.bf16.partialorder %v46, 1056980736
    %v57 = vsub.f32 1.0, %v45
    %v58 = vsel %vm56, 65537, 0
    %v59 = vunpack.c.l.b16 %v58
    %vm60 = vcmp.ne.s32.totalorder %v59, 0
    %v61 = vsel %vm60, %v45, %v57
    %v62 = vlog2.pop %v61
    %v63 = vmul.f32 %v62, 0.6931472
    %v64 = vmax.f32 %v63, -100.0
    %v65 = vsub.f32 0.0, %v64
    %vm66 = vcmask 64512
    %v67 = vsel %vm66, %v65, 0.0
    %68 = vadd.xlane.f32.xlu0 %v67
    %v69 = vpop.xlane.xlu0 %68
    %v70 = vmul.f32 %v69, 0.125
    %v71 = vsel %vm66, %v52, 0.0
    %72 = vadd.xlane.f32.xlu0 %v71
    %v73 = vpop.xlane.xlu0 %72
    %v74 = vmul.f32 %v52, %v45
    %v75 = vsel %vm66, %v74, 0.0
    %76 = vadd.xlane.f32.xlu0 %v75
    %v77 = vpop.xlane.xlu0 %76
    %v78 = vmul.f32 %v45, %v45
    %v79 = vmul.f32 %v52, %v78
    %v80 = vsel %vm66, %v79, 0.0
    %81 = vadd.xlane.f32.xlu0 %v80
    %v82 = vpop.xlane.xlu0 %81
    %v83 = vmul.f32 %v77, %v77
    %v84 = vmax.f32 %v73, 1.0
    %v85 = vrcp.pop %v84
    %v86 = vmul.f32 %v83, %v85
    %v87 = vsub.f32 %v82, %v86
    %v88 = vsub.f32 %v73, 1.0
    %v89 = vrcp.pop %v88
    %v90 = vmul.f32 %v87, %v89
    %v91 = vmul.f32 %v55, %v65
    %v92 = vsel %vm66, %v91, 0.0
    %93 = vadd.xlane.f32.xlu0 %v92
    %v94 = vpop.xlane.xlu0 %93
    %v95 = vmul.f32 %v48, %v64
    %v96 = vsel %vm66, %v95, 0.0
    %97 = vadd.xlane.f32.xlu0 %v96
    %v98 = vpop.xlane.xlu0 %97
    %v99 = vmul.f32 %v98, 1.442695
    %v100 = vpow.pop %v99
    %v101 = vsub.f32 1.0, %v100
    %v102 = vmul.f32 %v101, %v70
    %v104 = vlaneseq
    %v105 = vshrl.u32 %v104, 7
    %v106 = vsub.s32 0, %v105
    %v107 = vrot.slane %v49, %v106
    %v109 = vmul.f32 %v107, %v65
    %v110 = vsel %vm66, %v109, 0.0
    %111 = vadd.xlane.f32.xlu0 %v110
    %v112 = vpop.xlane.xlu0 %111
    %v113 = vmul.f32 %v90, 0.5
    %v114 = vadd.f32 %v70, %v113
    %v115 = vmul.f32 %v94, 0.7
    %v116 = vadd.f32 %v114, %v115
    %v117 = vmul.f32 %v102, 0.3
    %v118 = vadd.f32 %v116, %v117
    %v119 = vmul.f32 %v112, 0.9
    %v120 = vadd.f32 %v118, %v119
    %v121 = vlaneseq
    %v122 = vand.u32 %v121, 127
    %vm123 = vcmp.eq.s32.totalorder %v122, 0
    %v124 = vsel %vm123, 1, 0
    %v125 = vcvt.s32.f32 %v124
    %v126 = vmul.f32 %v120, %v125
    %vm127 = vcmp.eq.s32.totalorder %v122, 1
    %v128 = vsel %vm127, 1, 0
    %v129 = vcvt.s32.f32 %v128
    %v130 = vmul.f32 %v70, %v129
    %v131 = vadd.f32 %v126, %v130
    %vm132 = vcmp.eq.s32.totalorder %v122, 2
    %v133 = vsel %vm132, 1, 0
    %v134 = vcvt.s32.f32 %v133
    %v135 = vmul.f32 %v90, %v134
    %v136 = vadd.f32 %v131, %v135
    %vm137 = vcmp.eq.s32.totalorder %v122, 3
    %v138 = vsel %vm137, 1, 0
    %v139 = vcvt.s32.f32 %v138
    %v140 = vmul.f32 %v94, %v139
    %v141 = vadd.f32 %v136, %v140
    %vm142 = vcmp.eq.s32.totalorder %v122, 4
    %v143 = vsel %vm142, 1, 0
    %v144 = vcvt.s32.f32 %v143
    %v145 = vmul.f32 %v102, %v144
    %v146 = vadd.f32 %v141, %v145
    %vm147 = vcmp.eq.s32.totalorder %v122, 5
    %v148 = vsel %vm147, 1, 0
    %v149 = vcvt.s32.f32 %v148
    %v150 = vmul.f32 %v112, %v149
    %v151 = vadd.f32 %v146, %v150
    %152 = vst [vmem:[#allocation7] sm:$0xff] %v151
    // Predicated region
    $region26: #{tpu_custom_call.1} parent=1 // pred_check
      _
    $region27: #{tpu_custom_call.1} parent=1 // pred_check_branch
      %154 = sbr.rel (0) target = $region29
    $region28: #{tpu_custom_call.1} parent=1 // pred_region
      %s156 = ssub.s32 128, 128
      %157 = vsyncadd [#allocation4], %s156
      %s159 = sshll.u32 [#allocation7], 4
      %s160 = int_to_ptr.vmem [resolvable:$true] %s159
      %162 = dma.vmem_to_hbm [thread:$0]  %s160, 128, %s4, [#allocation4]
    $region29: #{tpu_custom_call.1} parent=1 // pred_fallthru
      _
    // Predicated region
    $region30: #{tpu_custom_call.1} parent=1 // pred_check
      _
    $region31: #{tpu_custom_call.1} parent=1 // pred_check_branch
      %164 = sbr.rel (0) target = $region33
    $region32: #{tpu_custom_call.1} parent=1 // pred_region
      %165 = dma.done [#allocation4], 128
    $region33: #{tpu_custom_call.1} parent=1 // pred_fallthru
      _
    %166 = vsyncpa [#allocation3], 1
    %167 = vsyncpa [#allocation6], 1
    %168 = vsyncpa [#allocation4], 1

</llo_original>
